<compile_context>
chip_gen: v7x
topology: tpu7x:2x2x1
jax: 0.10.0
libtpu: 0.0.40
codegen_flags: <defaults>
</compile_context>

<pallas_src>
import jax
import jax.numpy as jnp
from jax.experimental import pallas as pl
from jax.experimental.pallas import tpu as pltpu

BATCH   = 8
N_VARS  = 4                      # number of FuzzyVariable inputs
N_MFS   = 3                      # gaussian membership functions per variable
N_RULES = N_MFS ** N_VARS        # 81 rules (full cross-product premise)
R_PAD   = 128                    # rule axis padded to native lane width (keep 128, not 256)
N_OUT   = 2                      # out_variables
XP      = N_VARS + 1             # consequent input [x, 1]
N_FEAT  = 2 * N_VARS + 1         # [x^2, x, 1]
N_COLS  = N_OUT * XP + 1         # per-head coef blocks + denominator column
# head_activation=None -> identity (SummingLayer applies nothing)


def anfis_kernel(feat_ref, q_ref, coef_ref, out_ref):
    # feat_ref: (B, 2V+1)        [x^2, x, 1]
    # q_ref:    (2V+1, R_PAD)    quadratic-form premise matrix (zero-padded rules)
    # coef_ref: (R_PAD, N_COLS)  flattened consequent coeffs + ones denom column
    # out_ref:  (B, N_OUT)
    feat = feat_ref[...]                                        # (B, 9)

    # --- Fuzzification + Premise: one small MXU pass, one exp ---
    acc = jnp.dot(feat, q_ref[...],
                  preferred_element_type=jnp.float32)           # (B, R_PAD)
    firing = jnp.exp(acc)                                       # padded rules -> exp(0)=1

    # --- Normalization + Consequent + Summing: one K=128 matmul ---
    # proj[:, o*XP + j] = sum_r firing_r * coeffs[r, o, j]
    # proj[:, -1]       = sum_r firing_r  (denominator; pad rows are zero)
    proj = jnp.dot(firing, coef_ref[...],
                   preferred_element_type=jnp.float32)          # (B, N_COLS)

    xp = feat[:, N_VARS:]                                       # (B, XP) = [x, 1]
    denom = proj[:, N_COLS - 1:N_COLS]                          # (B, 1)
    inv_denom = 1.0 / denom                                     # one divide, reused per head

    nums = [jnp.sum(xp * proj[:, o * XP:(o + 1) * XP], axis=-1, keepdims=True)
            for o in range(N_OUT)]                              # static unroll, O small
    out_ref[...] = jnp.concatenate(nums, axis=-1) * inv_denom   # single (B, N_OUT) store


@jax.jit
def anfis_forward(x, q_mat, coef_flat):
    b = x.shape[0]
    feat = jnp.concatenate([x * x, x, jnp.ones((b, 1), x.dtype)], axis=1)  # (B, 2V+1)
    vmem = pl.BlockSpec(memory_space=pltpu.MemorySpace.VMEM)
    return pl.pallas_call(
        anfis_kernel,
        out_shape=jax.ShapeDtypeStruct((b, N_OUT), jnp.float32),
        in_specs=[vmem, vmem, vmem],
        out_specs=vmem,
    )(feat, q_mat, coef_flat)


def build_rule_params(centers, sigmas, mf_idx, coeffs):
    """Host-side rule expansion, quadratic-form packing, lane padding (one-time)."""
    vidx = jnp.arange(N_VARS)[:, None]
    c_rule = centers[vidx, mf_idx.T]               # (V, R): centers[v, idx_v[r]]
    s_rule = sigmas[vidx, mf_idx.T]                # (V, R)
    k_rule = -0.5 / (s_rule * s_rule)              # (V, R)
    pad_r = ((0, 0), (0, R_PAD - N_RULES))
    c_rule = jnp.pad(c_rule, pad_r)                # padded rules: center 0
    k_rule = jnp.pad(k_rule, pad_r)                # padded rules: exponent 0 -> firing 1

    # acc = [x^2, x, 1] @ q_mat  ==  sum_v k[v,r] * (x_v - c[v,r])^2
    q_mat = jnp.concatenate([
        k_rule,                                               # x_v^2 coefficients (V, R_PAD)
        -2.0 * k_rule * c_rule,                               # x_v   coefficients (V, R_PAD)
        jnp.sum(k_rule * c_rule * c_rule, axis=0, keepdims=True),  # constant      (1, R_PAD)
    ], axis=0).astype(jnp.float32)                            # (2V+1, R_PAD) = (9, 128)

    # coeffs: (R, O, V+1) -> (R_PAD, O*(V+1) + 1); last column = 1 for real rules only
    cf = coeffs.reshape(N_RULES, N_OUT * XP)
    cf = jnp.concatenate([cf, jnp.ones((N_RULES, 1), jnp.float32)], axis=1)
    cf = jnp.pad(cf, ((0, R_PAD - N_RULES), (0, 0)))          # padded rules: all-zero rows
    return q_mat, cf


def anfis_reference(x, centers, sigmas, mf_idx, coeffs):
    # pure-JAX reference mirroring the PyTorch forward semantics
    sel = (mf_idx.T[:, None, :] ==
           jnp.arange(N_MFS)[None, :, None]).astype(jnp.float32)                # (V, M, R)
    mu = jnp.exp(-0.5 * ((x[:, :, None] - centers[None]) / sigmas[None]) ** 2)  # (B, V, M)
    gathered = jnp.einsum('bvm,vmr->bvr', mu, sel)                              # (B, V, R)
    firing = jnp.prod(gathered, axis=1)                                         # (B, R)
    w = firing / jnp.sum(firing, axis=-1, keepdims=True)                        # (B, R)
    xp = jnp.concatenate([x, jnp.ones((x.shape[0], 1), x.dtype)], axis=1)
    rule_out = jnp.einsum('bj,roj->bro', xp, coeffs)                            # (B, R, O)
    return jnp.einsum('br,bro->bo', w, rule_out)                                # (B, O)


if __name__ == "__main__":
    key = jax.random.PRNGKey(0)
    kx, kc = jax.random.split(key)

    # deterministic synthetic parameters (shapes follow the module __init__)
    base = jnp.linspace(-1.5, 1.5, N_MFS, dtype=jnp.float32)
    centers = jnp.stack([base + 0.1 * v for v in range(N_VARS)], axis=0)      # (V, M)
    sigmas = jnp.full((N_VARS, N_MFS), 0.75, jnp.float32) + \
             0.05 * jnp.arange(N_VARS, dtype=jnp.float32)[:, None]            # (V, M)

    # rule cross-product membership-function indices
    mf_idx = jnp.stack(
        jnp.meshgrid(*([jnp.arange(N_MFS)] * N_VARS), indexing="ij"), axis=-1
    ).reshape(N_RULES, N_VARS)                                                # (R, V)

    # ConsequentLayer coeffs: (n_rules, n_out, n_vars + 1)
    coeffs = 0.1 * jax.random.normal(kc, (N_RULES, N_OUT, N_VARS + 1),
                                     dtype=jnp.float32)

    # input
    x = jax.random.normal(kx, (BATCH, N_VARS), dtype=jnp.float32)

    q_mat, coef_flat = build_rule_params(centers, sigmas, mf_idx, coeffs)

    out = anfis_forward(x, q_mat, coef_flat)
    out = jax.block_until_ready(out)

    ref = anfis_reference(x, centers, sigmas, mf_idx, coeffs)
    assert out.shape == (BATCH, N_OUT)
    assert jnp.allclose(out, ref, rtol=1e-4, atol=1e-5), (out, ref)
    print("KERNEL_OK")
</pallas_src>

<mosaic_0001>
module attributes {stable_mosaic.version = 11 : i64} {
  func.func @anfis_kernel(%arg0: memref<8x9xf32, #tpu.memory_space<vmem>>, %arg1: memref<9x128xf32, #tpu.memory_space<vmem>>, %arg2: memref<128x11xf32, #tpu.memory_space<vmem>>, %arg3: memref<8x2xf32, #tpu.memory_space<vmem>>) attributes {dimension_semantics = [], scalar_prefetch = 0 : i64, scratch_operands = 0 : i64, tpu.core_type = #tpu.core_type<tc>} {
    %c0 = arith.constant 0 : index
    %c0_0 = arith.constant 0 : index
    %0 = vector.load %arg0[%c0, %c0_0] : memref<8x9xf32, #tpu.memory_space<vmem>>, vector<8x9xf32>
    %c0_1 = arith.constant 0 : index
    %c0_2 = arith.constant 0 : index
    %1 = vector.load %arg1[%c0_1, %c0_2] : memref<9x128xf32, #tpu.memory_space<vmem>>, vector<9x128xf32>
    %cst = arith.constant dense<0.000000e+00> : vector<8x128xf32>
    %2 = tpu.matmul %0, %1, %cst {dimension_numbers = #tpu.dot_dimension_numbers<[1], [0], [0], [1], [0, 0, 1, 1], [], []>} : vector<8x9xf32>, vector<9x128xf32>, vector<8x128xf32> -> vector<8x128xf32>
    %3 = math.exp %2 : vector<8x128xf32>
    %c0_3 = arith.constant 0 : index
    %c0_4 = arith.constant 0 : index
    %4 = vector.load %arg2[%c0_3, %c0_4] : memref<128x11xf32, #tpu.memory_space<vmem>>, vector<128x11xf32>
    %cst_5 = arith.constant dense<0.000000e+00> : vector<8x11xf32>
    %5 = tpu.matmul %3, %4, %cst_5 {dimension_numbers = #tpu.dot_dimension_numbers<[1], [0], [0], [1], [0, 0, 1, 1], [], []>} : vector<8x128xf32>, vector<128x11xf32>, vector<8x11xf32> -> vector<8x11xf32>
    %6 = vector.extract_strided_slice %0 {offsets = [0, 4], sizes = [8, 5], strides = [1, 1]} : vector<8x9xf32> to vector<8x5xf32>
    %7 = vector.extract_strided_slice %5 {offsets = [0, 10], sizes = [8, 1], strides = [1, 1]} : vector<8x11xf32> to vector<8x1xf32>
    %cst_6 = arith.constant 1.000000e+00 : f32
    %8 = vector.broadcast %cst_6 : f32 to vector<8x1xf32>
    %9 = arith.divf %8, %7 : vector<8x1xf32>
    %10 = vector.extract_strided_slice %5 {offsets = [0, 0], sizes = [8, 5], strides = [1, 1]} : vector<8x11xf32> to vector<8x5xf32>
    %11 = arith.mulf %6, %10 : vector<8x5xf32>
    %cst_7 = arith.constant dense<0.000000e+00> : vector<8xf32>
    %12 = vector.multi_reduction <add>, %11, %cst_7 [1] : vector<8x5xf32> to vector<8xf32>
    %13 = vector.shape_cast %12 : vector<8xf32> to vector<8x1xf32>
    %14 = vector.extract_strided_slice %5 {offsets = [0, 5], sizes = [8, 5], strides = [1, 1]} : vector<8x11xf32> to vector<8x5xf32>
    %15 = arith.mulf %6, %14 : vector<8x5xf32>
    %cst_8 = arith.constant dense<0.000000e+00> : vector<8xf32>
    %16 = vector.multi_reduction <add>, %15, %cst_8 [1] : vector<8x5xf32> to vector<8xf32>
    %17 = vector.shape_cast %16 : vector<8xf32> to vector<8x1xf32>
    %18 = tpu.concatenate %13, %17 in 1 : vector<8x1xf32>, vector<8x1xf32> -> vector<8x2xf32>
    %19 = vector.broadcast %9 : vector<8x1xf32> to vector<8x2xf32>
    %20 = arith.mulf %18, %19 : vector<8x2xf32>
    %c0_9 = arith.constant 0 : index
    %c0_10 = arith.constant 0 : index
    %21 = vector.load %arg3[%c0_9, %c0_10] : memref<8x2xf32, #tpu.memory_space<vmem>>, vector<8x2xf32>
    tpu.vector_store %arg3[%c0_9, %c0_10], %20 {strides = array<i32>} : memref<8x2xf32, #tpu.memory_space<vmem>>, vector<8x2xf32>,
    return
  }
}

</mosaic_0001>

<llo_original>
// kernel: mul.1
$region0: #{mul.1}
  #allocation0 [shape = 's32[1]{0}', space=sflag, size = 0x4, scoped, tag = 'scoped memory for mul.1']
  %s0 = inlined_call_operand.vmem [shape: f32[8,4], index: 0, kind: input, shape index: {}, may-alias: {0,1}]
  %s1 = inlined_call_operand.vmem [shape: f32[8,4], index: 1, kind: input, shape index: {}, may-alias: {0,1}]
  %s2 = inlined_call_operand.vmem [shape: f32[8,4], index: 2, kind: output, shape index: {}]
  %v3 = vld [vmem:[%s0] sm:$0xff]
  %v4 = vld [vmem:[%s1] sm:$0xff]
  %5 = xla_tuple %v3, %v4
  %6 = xla_tuple %5
  %v7 = vmul.f32 %v3, %v4
  %8 = xla_tuple %v7
  %9 = vst [vmem:[%s2] sm:$0xff] %v7

// kernel: anfis_forward.1
$region0: #{anfis_forward.1}
  #allocation0 [shape = 'u32[]', space=smem, size = 0x4, offset = 0x4, fixed_abs, tag = 'smem constant byte address 0x4 - core index']
  #allocation1 [shape = 'u32[144,128]{1,0:T(1,128)}', space=vmem, size = 0x12000, scoped, tag = 'internal scratch']
  %s0 = inlined_call_operand.vmem [shape: f32[8,9], index: 0, kind: input, shape index: {}]
  %s1 = inlined_call_operand.vmem [shape: f32[9,128], index: 1, kind: input, shape index: {}]
  %s2 = inlined_call_operand.vmem [shape: f32[128,11], index: 2, kind: input, shape index: {}]
  %s3 = inlined_call_operand.vmem [shape: f32[8,2], index: 3, kind: output, shape index: {}]
  %s4 = sld [smem:[#allocation0]]
  $region22: #{anfis_forward.1} parent=0
    _
  %s6 = ssub.s32 1, %s4
  %s7 = scalar_select 0, %s6, %s4
  // Predicated region
  $region2: #{anfis_forward.1} parent=0 // pred_check
    _
  $region3: #{anfis_forward.1} parent=0 // pred_check_branch
    %9 = sbr.rel (0) target = $region5
  $region4: #{anfis_forward.1} parent=0 // pred_region
    _
  $region5: #{anfis_forward.1} parent=0 // pred_fallthru
    _
  // Predicated region
  $region6: #{anfis_forward.1} parent=0 // pred_check
    _
  $region7: #{anfis_forward.1} parent=0 // pred_check_branch
    %11 = sbr.rel (0) target = $region9
  $region8: #{anfis_forward.1} parent=0 // pred_region
    _
  $region9: #{anfis_forward.1} parent=0 // pred_fallthru
    _
  // Predicated region
  $region10: #{anfis_forward.1} parent=0 // pred_check
    _
  $region11: #{anfis_forward.1} parent=0 // pred_check_branch
    %13 = sbr.rel (0) target = $region13
  $region12: #{anfis_forward.1} parent=0 // pred_region
    _
  $region13: #{anfis_forward.1} parent=0 // pred_fallthru
    _
  %v14 = vld [vmem:[%s0] sm:$0xff]
  %v15 = vld [vmem:[%s1] sm:$0xff]
  %v16 = vld [vmem:[%s1 + $0x8] sm:$0x1]
  %vm17 = vcmask 72704
  %v19 = vsel %vm17, %v14, 0
  %vm21 = vcmask 1040384
  %v23 = vsel %vm21, %v16, 0
  %25 = vmatprep.subr.mxu0 0.0
  %26 = vmatpush1.msra.mxu0 %v15
  %27 = vmatprep.subr.mxu0 0.0
  %28 = vmatpush1.msra.mxu0 %v23
  %29 = vmatprep.subr.mxu0 0.0
  %30 = vmatpush1.msra.mxu0 0.0
  %31 = vmatprep.subr.mxu0 0.0
  %32 = vmatpush1.msra.mxu0 0.0
  %33 = vmatprep.subr.mxu0 0.0
  %34 = vmatpush1.msra.mxu0 0.0
  %35 = vmatprep.subr.mxu0 0.0
  %36 = vmatpush1.msra.mxu0 0.0
  %37 = vmatprep.subr.mxu0 0.0
  %38 = vmatpush1.msra.mxu0 0.0
  %39 = vmatprep.subr.mxu0 0.0
  %40 = vmatpush1.msra.mxu0 0.0
  %41 = vmatprep.subr.mxu0 0.0
  %42 = vmatpush1.msra.mxu0 0.0
  %43 = vmatprep.subr.mxu0 0.0
  %44 = vmatpush1.msra.mxu0 0.0
  %45 = vmatprep.subr.mxu0 0.0
  %46 = vmatpush1.msra.mxu0 0.0
  %47 = vmatprep.subr.mxu0 0.0
  %48 = vmatpush1.msra.mxu0 0.0
  %49 = vmatprep.subr.mxu0 0.0
  %50 = vmatpush1.msra.mxu0 0.0
  %51 = vmatprep.subr.mxu0 0.0
  %52 = vmatpush1.msra.mxu0 0.0
  %53 = vmatprep.subr.mxu0 0.0
  %54 = vmatpush1.msra.mxu0 0.0
  %55 = vmatprep.subr.mxu0 0.0
  %56 = vmatpush1.msra.mxu0 0.0
  %57 = vmatprep.subr.mxu0 0.0
  %58 = vmatpush1.msra.mxu0 0.0
  %59 = vmatprep.subr.mxu0 0.0
  %60 = vmatpush1.msra.mxu0 0.0
  %61 = vmatprep.subr.mxu0 0.0
  %62 = vmatpush1.msra.mxu0 0.0
  %63 = vmatprep.subr.mxu0 0.0
  %64 = vmatpush1.msra.mxu0 0.0
  %65 = vmatprep.subr.mxu0 0.0
  %66 = vmatpush1.msra.mxu0 0.0
  %67 = vmatprep.subr.mxu0 0.0
  %68 = vmatpush1.msra.mxu0 0.0
  %69 = vmatprep.subr.mxu0 0.0
  %70 = vmatpush1.msra.mxu0 0.0
  %71 = vmatprep.subr.mxu0 0.0
  %72 = vmatpush1.msra.mxu0 0.0
  %73 = vmatprep.subr.mxu0 0.0
  %74 = vmatpush1.msra.mxu0 0.0
  %75 = vmatprep.subr.mxu0 0.0
  %76 = vmatpush1.msra.mxu0 0.0
  %77 = vmatprep.subr.mxu0 0.0
  %78 = vmatpush1.msra.mxu0 0.0
  %79 = vmatprep.subr.mxu0 0.0
  %80 = vmatpush1.msra.mxu0 0.0
  %81 = vmatprep.subr.mxu0 0.0
  %82 = vmatpush1.msra.mxu0 0.0
  %83 = vmatprep.subr.mxu0 0.0
  %84 = vmatpush1.msra.mxu0 0.0
  %85 = vmatprep.subr.mxu0 0.0
  %86 = vmatpush1.msra.mxu0 0.0
  %87 = vmatprep.subr.mxu0 0.0
  %88 = vmatpush1.msra.mxu0 0.0
  %89 = vmatprep.mubr.f32.mxu0 0.0
  %90 = vmatmul.mubr.f32.gmra.mrb[0].mxu0 %v19
  %v91 = vpop.f32.mrb[0].mxu0
  %v92 = vadd.f32 0.0, %v91
  %v93 = vpop.f32.mrb[0].mxu0
  %94 = vdwg.mxu0
  %v95 = vmul.f32 %v92, 1.442695
  %v96 = vpow.pop %v95
  %v97 = vld [vmem:[%s2] sm:$0xff]
  %v98 = vld [vmem:[%s2 + $0x8] sm:$0xff]
  %v99 = vld [vmem:[%s2 + $0x10] sm:$0xff]
  %v100 = vld [vmem:[%s2 + $0x18] sm:$0xff]
  %v101 = vld [vmem:[%s2 + $0x20] sm:$0xff]
  %v102 = vld [vmem:[%s2 + $0x28] sm:$0xff]
  %v103 = vld [vmem:[%s2 + $0x30] sm:$0xff]
  %v104 = vld [vmem:[%s2 + $0x38] sm:$0xff]
  %v105 = vld [vmem:[%s2 + $0x40] sm:$0xff]
  %v106 = vld [vmem:[%s2 + $0x48] sm:$0xff]
  %v107 = vld [vmem:[%s2 + $0x50] sm:$0xff]
  %v108 = vld [vmem:[%s2 + $0x58] sm:$0xff]
  %v109 = vld [vmem:[%s2 + $0x60] sm:$0xff]
  %v110 = vld [vmem:[%s2 + $0x68] sm:$0xff]
  %v111 = vld [vmem:[%s2 + $0x70] sm:$0xff]
  %v112 = vld [vmem:[%s2 + $0x78] sm:$0xff]
  %113 = vmatprep.subr.mxu0 0.0
  %114 = vmatpush1.msra.mxu0 %v97
  %115 = vmatprep.subr.mxu0 0.0
  %116 = vmatpush1.msra.mxu0 %v98
  %117 = vmatprep.subr.mxu0 0.0
  %118 = vmatpush1.msra.mxu0 %v99
  %119 = vmatprep.subr.mxu0 0.0
  %120 = vmatpush1.msra.mxu0 %v100
  %121 = vmatprep.subr.mxu0 0.0
  %122 = vmatpush1.msra.mxu0 %v101
  %123 = vmatprep.subr.mxu0 0.0
  %124 = vmatpush1.msra.mxu0 %v102
  %125 = vmatprep.subr.mxu0 0.0
  %126 = vmatpush1.msra.mxu0 %v103
  %127 = vmatprep.subr.mxu0 0.0
  %128 = vmatpush1.msra.mxu0 %v104
  %129 = vmatprep.subr.mxu0 0.0
  %130 = vmatpush1.msra.mxu0 %v105
  %131 = vmatprep.subr.mxu0 0.0
  %132 = vmatpush1.msra.mxu0 %v106
  %133 = vmatprep.subr.mxu0 0.0
  %134 = vmatpush1.msra.mxu0 %v107
  %135 = vmatprep.subr.mxu0 0.0
  %136 = vmatpush1.msra.mxu0 %v108
  %137 = vmatprep.subr.mxu0 0.0
  %138 = vmatpush1.msra.mxu0 %v109
  %139 = vmatprep.subr.mxu0 0.0
  %140 = vmatpush1.msra.mxu0 %v110
  %141 = vmatprep.subr.mxu0 0.0
  %142 = vmatpush1.msra.mxu0 %v111
  %143 = vmatprep.subr.mxu0 0.0
  %144 = vmatpush1.msra.mxu0 %v112
  %145 = vmatprep.subr.mxu0 0.0
  %146 = vmatpush1.msra.mxu0 0.0
  %147 = vmatprep.subr.mxu0 0.0
  %148 = vmatpush1.msra.mxu0 0.0
  %149 = vmatprep.subr.mxu0 0.0
  %150 = vmatpush1.msra.mxu0 0.0
  %151 = vmatprep.subr.mxu0 0.0
  %152 = vmatpush1.msra.mxu0 0.0
  %153 = vmatprep.subr.mxu0 0.0
  %154 = vmatpush1.msra.mxu0 0.0
  %155 = vmatprep.subr.mxu0 0.0
  %156 = vmatpush1.msra.mxu0 0.0
  %157 = vmatprep.subr.mxu0 0.0
  %158 = vmatpush1.msra.mxu0 0.0
  %159 = vmatprep.subr.mxu0 0.0
  %160 = vmatpush1.msra.mxu0 0.0
  %161 = vmatprep.subr.mxu0 0.0
  %162 = vmatpush1.msra.mxu0 0.0
  %163 = vmatprep.subr.mxu0 0.0
  %164 = vmatpush1.msra.mxu0 0.0
  %165 = vmatprep.subr.mxu0 0.0
  %166 = vmatpush1.msra.mxu0 0.0
  %167 = vmatprep.subr.mxu0 0.0
  %168 = vmatpush1.msra.mxu0 0.0
  %169 = vmatprep.subr.mxu0 0.0
  %170 = vmatpush1.msra.mxu0 0.0
  %171 = vmatprep.subr.mxu0 0.0
  %172 = vmatpush1.msra.mxu0 0.0
  %173 = vmatprep.subr.mxu0 0.0
  %174 = vmatpush1.msra.mxu0 0.0
  %175 = vmatprep.subr.mxu0 0.0
  %176 = vmatpush1.msra.mxu0 0.0
  %177 = vmatprep.mubr.f32.mxu0 0.0
  %178 = vmatmul.mubr.f32.gmra.mrb[0].mxu0 %v96
  %v179 = vpop.f32.mrb[0].mxu0
  %v180 = vadd.f32 0.0, %v179
  %v181 = vpop.f32.mrb[0].mxu0
  %182 = vdwg.mxu0
  %v183 = vrcp.pop %v180
  %v184 = vmul.f32 1.0, %v183
  %186 = vrot.lane.b32.xlu0 %v180, 4
  %v187 = vpop.permute.xlu0 %186
  %v189 = vmul.f32 %v14, %v187
  %191 = vrot.lane.b32.xlu0 %v189, 124
  %v192 = vpop.permute.xlu0 %191
  %vm194 = vcmask 39936
  %v195 = vsel %vm194, %v192, 0.0
  %196 = vadd.xlane.f32.xlu0 %v195
  %v197 = vpop.xlane.xlu0 %196
  %198 = vrot.lane.b32.xlu0 %v180, 127
  %v199 = vpop.permute.xlu0 %198
  %v201 = vmul.f32 %v14, %v199
  %203 = vrot.lane.b32.xlu0 %v201, 124
  %v204 = vpop.permute.xlu0 %203
  %v206 = vsel %vm194, %v204, 0.0
  %207 = vadd.xlane.f32.xlu0 %v206
  %v208 = vpop.xlane.xlu0 %207
  %vm209 = vcmask 7168
  %v210 = vsel %vm209, %v197, %v208
  %212 = vset.pattern.permute.xlu0 10
  %213 = vperm.xlu0 %212, %v184
  %v214 = vpop.permute.xlu0 %213
  %v216 = vmul.f32 %v210, %v214
  %vm217 = vcmask 15360
  %218 = vst.msk [vmem:[%s3] sm:$0xff] %vm217, %v216
  // Predicated region
  $region14: #{anfis_forward.1} parent=0 // pred_check
    _
  $region15: #{anfis_forward.1} parent=0 // pred_check_branch
    %220 = sbr.rel (0) target = $region17
  $region16: #{anfis_forward.1} parent=0 // pred_region
    _
  $region17: #{anfis_forward.1} parent=0 // pred_fallthru
    _
  // Predicated region
  $region18: #{anfis_forward.1} parent=0 // pred_check
    _
  $region19: #{anfis_forward.1} parent=0 // pred_check_branch
    %222 = sbr.rel (0) target = $region21
  $region20: #{anfis_forward.1} parent=0 // pred_region
    _
  $region21: #{anfis_forward.1} parent=0 // pred_fallthru
    _

</llo_original>
